<compile_context>
chip_gen: v6e
topology: v6e:2x2x1
jax: 0.10.0
libtpu: 0.0.40
codegen_flags: <defaults>
</compile_context>

<pallas_src>
import functools

import jax
import jax.numpy as jnp
from jax import lax
from jax.experimental import pallas as pl
from jax.experimental.pallas import tpu as pltpu


def _round_up(x: int, m: int) -> int:
    return (x + m - 1) // m * m


def phrase_inference_kernel(idx_ref,    # (TM, 3) int32: (subject, region, object) ids
                            obj_ref,    # (N_obj_pad, D_pad)   resident object features
                            reg_ref,    # (N_reg_pad, D_pad)   resident region features
                            w_ref,      # (3, D_pad, D_out_pad) resident split weight
                            b_ref,      # (1, D_out_pad)       resident bias
                            out_ref,    # (TM, D_out_pad)      output tile
                            ps_ref,     # scratch (N_obj_pad, D_out_pad): F_obj @ W_sub
                            pr_ref,     # scratch (N_reg_pad, D_out_pad): F_reg @ W_reg
                            po_ref):    # scratch (N_obj_pad, D_out_pad): F_obj @ W_obj
    # One-time projection of the feature tables through the three weight blocks.
    # Scratch persists across grid steps ("arbitrary" axis), so this runs once.
    @pl.when(pl.program_id(0) == 0)
    def _():
        ps_ref[...] = jnp.dot(obj_ref[...], w_ref[0],
                              preferred_element_type=jnp.float32)
        pr_ref[...] = jnp.dot(reg_ref[...], w_ref[1],
                              preferred_element_type=jnp.float32)
        po_ref[...] = jnp.dot(obj_ref[...], w_ref[2],
                              preferred_element_type=jnp.float32)

    tm = out_ref.shape[0]
    n_obj = ps_ref.shape[0]
    n_reg = pr_ref.shape[0]

    sub_idx = idx_ref[:, 0:1]   # (TM, 1)
    reg_idx = idx_ref[:, 1:2]
    obj_idx = idx_ref[:, 2:3]

    obj_cols = lax.broadcasted_iota(jnp.int32, (tm, n_obj), 1)
    reg_cols = lax.broadcasted_iota(jnp.int32, (tm, n_reg), 1)

    # Exact one-hot row selectors (VPU compare); the gather itself is an MXU
    # matmul against the pre-projected tables -> result is exactly P[idx].
    oh_sub = (obj_cols == sub_idx).astype(jnp.float32)
    oh_reg = (reg_cols == reg_idx).astype(jnp.float32)
    oh_obj = (obj_cols == obj_idx).astype(jnp.float32)

    acc = jnp.dot(oh_sub, ps_ref[...], preferred_element_type=jnp.float32)
    acc = acc + jnp.dot(oh_reg, pr_ref[...], preferred_element_type=jnp.float32)
    acc = acc + jnp.dot(oh_obj, po_ref[...], preferred_element_type=jnp.float32)

    out_ref[...] = jnp.maximum(acc + b_ref[...], 0.0).astype(out_ref.dtype)


@functools.partial(jax.jit, static_argnames=("block_m",))
def phrase_inference(feature_obj, feature_region, mat_predicate, w, b, *,
                     block_m: int = 128):
    """Pallas forward.  w: [3*D, D_out], b: [D_out]."""
    n_obj, d = feature_obj.shape
    n_reg = feature_region.shape[0]
    n_pred = mat_predicate.shape[0]
    d_out = w.shape[1]

    f32 = jnp.float32
    d_pad = _round_up(d, 128)
    d_out_pad = _round_up(d_out, 128)
    n_obj_pad = _round_up(n_obj, 8)
    n_reg_pad = _round_up(n_reg, 8)
    tm = block_m
    n_pred_pad = _round_up(max(n_pred, 1), tm)

    # Zero-pad feature tables (rows to sublane multiple, feature dim to 128 lanes).
    fo = jnp.zeros((n_obj_pad, d_pad), f32).at[:n_obj, :d].set(
        feature_obj.astype(f32))
    fr = jnp.zeros((n_reg_pad, d_pad), f32).at[:n_reg, :d].set(
        feature_region.astype(f32))

    # Split weight into its (subject, region, object) K-blocks, each padded to
    # (D_pad, D_out_pad); shipped as one (3, D_pad, D_out_pad) resident input.
    w = w.astype(f32)
    w_pad = jnp.zeros((3, d_pad, d_out_pad), f32)
    w_pad = w_pad.at[0, :d, :d_out].set(w[0:d])
    w_pad = w_pad.at[1, :d, :d_out].set(w[d:2 * d])
    w_pad = w_pad.at[2, :d, :d_out].set(w[2 * d:3 * d])

    b_pad = jnp.zeros((1, d_out_pad), f32).at[0, :d_out].set(b.astype(f32))

    # Predicate ids padded to a multiple of TM (padding rows gather row 0 and
    # are sliced away); a normal VMEM input tiled (TM, 3).
    idx = jnp.zeros((n_pred_pad, 3), jnp.int32).at[:n_pred].set(
        mat_predicate.astype(jnp.int32))

    grid = (n_pred_pad // tm,)
    out = pl.pallas_call(
        phrase_inference_kernel,
        out_shape=jax.ShapeDtypeStruct((n_pred_pad, d_out_pad), f32),
        grid_spec=pltpu.PrefetchScalarGridSpec(
            num_scalar_prefetch=0,
            grid=grid,
            in_specs=[
                pl.BlockSpec((tm, 3), lambda i: (i, 0)),                    # predicate ids
                pl.BlockSpec((n_obj_pad, d_pad), lambda i: (0, 0)),         # obj features (resident)
                pl.BlockSpec((n_reg_pad, d_pad), lambda i: (0, 0)),         # region features (resident)
                pl.BlockSpec((3, d_pad, d_out_pad), lambda i: (0, 0, 0)),   # split W (resident)
                pl.BlockSpec((1, d_out_pad), lambda i: (0, 0)),             # bias (resident)
            ],
            out_specs=pl.BlockSpec((tm, d_out_pad), lambda i: (i, 0)),
            scratch_shapes=[
                pltpu.VMEM((n_obj_pad, d_out_pad), f32),   # F_obj @ W_sub
                pltpu.VMEM((n_reg_pad, d_out_pad), f32),   # F_reg @ W_reg
                pltpu.VMEM((n_obj_pad, d_out_pad), f32),   # F_obj @ W_obj
            ],
        ),
        compiler_params=pltpu.CompilerParams(
            # Scratch (projected tables) carries state across grid steps, so the
            # axis must be sequential.
            dimension_semantics=("arbitrary",)),
    )(idx, fo, fr, w_pad, b_pad)

    return out[:n_pred, :d_out]


def phrase_inference_ref(feature_obj, feature_region, mat_predicate, w, b):
    """Pure-JAX reference matching the PyTorch-style semantics."""
    sub = feature_obj[mat_predicate[:, 0]]
    reg = feature_region[mat_predicate[:, 1]]
    obj = feature_obj[mat_predicate[:, 2]]
    fused = jnp.concatenate([sub, reg, obj], axis=1) @ w + b
    return jnp.maximum(fused, 0.0)


if __name__ == "__main__":
    # Small, deterministic shapes consistent with the module's interface.
    # TODO(synk): the reference forward is abstract (raises NotImplementedError);
    # this implements the standard gather + linear + ReLU phrase fusion.
    N_obj, N_reg, N_pred = 8, 8, 8
    D, D_out = 32, 32

    key = jax.random.PRNGKey(0)
    k_obj, k_reg, k_mat, k_w, k_b = jax.random.split(key, 5)

    feature_obj = jax.random.normal(k_obj, (N_obj, D), dtype=jnp.float32)
    feature_region = jax.random.normal(k_reg, (N_reg, D), dtype=jnp.float32)
    mat_predicate = jnp.stack(
        [
            jax.random.randint(jax.random.fold_in(k_mat, 0), (N_pred,), 0, N_obj),
            jax.random.randint(jax.random.fold_in(k_mat, 1), (N_pred,), 0, N_reg),
            jax.random.randint(jax.random.fold_in(k_mat, 2), (N_pred,), 0, N_obj),
        ],
        axis=1,
    ).astype(jnp.int32)

    # Deterministic synthetic parameters (no checkpoint load).
    w = (jax.random.normal(k_w, (3 * D, D_out), dtype=jnp.float32)
         * (1.0 / jnp.sqrt(3.0 * D)))
    b = jax.random.normal(k_b, (D_out,), dtype=jnp.float32) * 0.01

    out = phrase_inference(feature_obj, feature_region, mat_predicate, w, b)
    out = jax.block_until_ready(out)

    ref = phrase_inference_ref(feature_obj, feature_region, mat_predicate, w, b)
    assert out.shape == (N_pred, D_out)
    assert jnp.allclose(out, ref, atol=1e-4, rtol=1e-4), "mismatch vs reference"

    print("KERNEL_OK")
</pallas_src>

<mosaic_0001>
module attributes {stable_mosaic.version = 11 : i64} {
  func.func @phrase_inference_kernel(%arg0: i32, %arg1: memref<128x3xi32, #tpu.memory_space<vmem>>, %arg2: memref<8x128xf32, #tpu.memory_space<vmem>>, %arg3: memref<8x128xf32, #tpu.memory_space<vmem>>, %arg4: memref<3x128x128xf32, #tpu.memory_space<vmem>>, %arg5: memref<1x128xf32, #tpu.memory_space<vmem>>, %arg6: memref<128x128xf32, #tpu.memory_space<vmem>>, %arg7: memref<8x128xf32, #tpu.memory_space<vmem>>, %arg8: memref<8x128xf32, #tpu.memory_space<vmem>>, %arg9: memref<8x128xf32, #tpu.memory_space<vmem>>) attributes {dimension_semantics = [#tpu.dimension_semantics<arbitrary>], iteration_bounds = array<i64: 1>, scalar_prefetch = 0 : i64, scratch_operands = 3 : i64, tpu.core_type = #tpu.core_type<tc>, window_params = [{transform_indices = @transform_0, window_bounds = array<i64: 128, 3>}, {pipeline_mode = #tpu.pipeline_mode<synchronous>, transform_indices = @transform_1, window_bounds = array<i64: 8, 128>}, {pipeline_mode = #tpu.pipeline_mode<synchronous>, transform_indices = @transform_2, window_bounds = array<i64: 8, 128>}, {pipeline_mode = #tpu.pipeline_mode<synchronous>, transform_indices = @transform_3, window_bounds = array<i64: 3, 128, 128>}, {pipeline_mode = #tpu.pipeline_mode<synchronous>, transform_indices = @transform_4, window_bounds = array<i64: 1, 128>}, {transform_indices = @transform_5, window_bounds = array<i64: 128, 128>}]} {
    %c0_i32 = arith.constant 0 : i32
    %0 = arith.cmpi eq, %arg0, %c0_i32 : i32
    %1 = arith.extui %0 : i1 to i32
    %c0_i32_0 = arith.constant 0 : i32
    %2 = arith.cmpi ne, %1, %c0_i32_0 : i32
    scf.if %2 {
      %c0_17 = arith.constant 0 : index
      %c0_18 = arith.constant 0 : index
      %34 = vector.load %arg2[%c0_17, %c0_18] : memref<8x128xf32, #tpu.memory_space<vmem>>, vector<8x128xf32>
      %c0_19 = arith.constant 0 : index
      %c0_20 = arith.constant 0 : index
      %c0_21 = arith.constant 0 : index
      %35 = vector.load %arg4[%c0_19, %c0_20, %c0_21] : memref<3x128x128xf32, #tpu.memory_space<vmem>>, vector<1x128x128xf32>
      %36 = vector.shape_cast %35 : vector<1x128x128xf32> to vector<128x128xf32>
      %cst_22 = arith.constant dense<0.000000e+00> : vector<8x128xf32>
      %37 = tpu.matmul %34, %36, %cst_22 {dimension_numbers = #tpu.dot_dimension_numbers<[1], [0], [0], [1], [0, 0, 1, 1], [], []>} : vector<8x128xf32>, vector<128x128xf32>, vector<8x128xf32> -> vector<8x128xf32>
      %c0_23 = arith.constant 0 : index
      %c0_24 = arith.constant 0 : index
      %38 = vector.load %arg7[%c0_23, %c0_24] : memref<8x128xf32, #tpu.memory_space<vmem>>, vector<8x128xf32>
      tpu.vector_store %arg7[%c0_23, %c0_24], %37 {strides = array<i32>} : memref<8x128xf32, #tpu.memory_space<vmem>>, vector<8x128xf32>,
      %c0_25 = arith.constant 0 : index
      %c0_26 = arith.constant 0 : index
      %39 = vector.load %arg3[%c0_25, %c0_26] : memref<8x128xf32, #tpu.memory_space<vmem>>, vector<8x128xf32>
      %c1_27 = arith.constant 1 : index
      %c0_28 = arith.constant 0 : index
      %c0_29 = arith.constant 0 : index
      %40 = vector.load %arg4[%c1_27, %c0_28, %c0_29] : memref<3x128x128xf32, #tpu.memory_space<vmem>>, vector<1x128x128xf32>
      %41 = vector.shape_cast %40 : vector<1x128x128xf32> to vector<128x128xf32>
      %cst_30 = arith.constant dense<0.000000e+00> : vector<8x128xf32>
      %42 = tpu.matmul %39, %41, %cst_30 {dimension_numbers = #tpu.dot_dimension_numbers<[1], [0], [0], [1], [0, 0, 1, 1], [], []>} : vector<8x128xf32>, vector<128x128xf32>, vector<8x128xf32> -> vector<8x128xf32>
      %c0_31 = arith.constant 0 : index
      %c0_32 = arith.constant 0 : index
      %43 = vector.load %arg8[%c0_31, %c0_32] : memref<8x128xf32, #tpu.memory_space<vmem>>, vector<8x128xf32>
      tpu.vector_store %arg8[%c0_31, %c0_32], %42 {strides = array<i32>} : memref<8x128xf32, #tpu.memory_space<vmem>>, vector<8x128xf32>,
      %c0_33 = arith.constant 0 : index
      %c0_34 = arith.constant 0 : index
      %44 = vector.load %arg2[%c0_33, %c0_34] : memref<8x128xf32, #tpu.memory_space<vmem>>, vector<8x128xf32>
      %c2_35 = arith.constant 2 : index
      %c0_36 = arith.constant 0 : index
      %c0_37 = arith.constant 0 : index
      %45 = vector.load %arg4[%c2_35, %c0_36, %c0_37] : memref<3x128x128xf32, #tpu.memory_space<vmem>>, vector<1x128x128xf32>
      %46 = vector.shape_cast %45 : vector<1x128x128xf32> to vector<128x128xf32>
      %cst_38 = arith.constant dense<0.000000e+00> : vector<8x128xf32>
      %47 = tpu.matmul %44, %46, %cst_38 {dimension_numbers = #tpu.dot_dimension_numbers<[1], [0], [0], [1], [0, 0, 1, 1], [], []>} : vector<8x128xf32>, vector<128x128xf32>, vector<8x128xf32> -> vector<8x128xf32>
      %c0_39 = arith.constant 0 : index
      %c0_40 = arith.constant 0 : index
      %48 = vector.load %arg9[%c0_39, %c0_40] : memref<8x128xf32, #tpu.memory_space<vmem>>, vector<8x128xf32>
      tpu.vector_store %arg9[%c0_39, %c0_40], %47 {strides = array<i32>} : memref<8x128xf32, #tpu.memory_space<vmem>>, vector<8x128xf32>,
    } else {
    }
    %c0 = arith.constant 0 : index
    %c0_1 = arith.constant 0 : index
    %3 = vector.load %arg1[%c0, %c0_1] : memref<128x3xi32, #tpu.memory_space<vmem>>, vector<128x1xi32>
    %c0_2 = arith.constant 0 : index
    %c1 = arith.constant 1 : index
    %4 = vector.load %arg1[%c0_2, %c1] : memref<128x3xi32, #tpu.memory_space<vmem>>, vector<128x1xi32>
    %c0_3 = arith.constant 0 : index
    %c2 = arith.constant 2 : index
    %5 = vector.load %arg1[%c0_3, %c2] : memref<128x3xi32, #tpu.memory_space<vmem>>, vector<128x1xi32>
    %6 = tpu.iota {dimensions = array<i32: 1>} : vector<128x8xi32>
    %7 = tpu.iota {dimensions = array<i32: 1>} : vector<128x8xi32>
    %8 = vector.broadcast %3 : vector<128x1xi32> to vector<128x8xi32>
    %9 = arith.cmpi eq, %6, %8 : vector<128x8xi32>
    %10 = arith.extui %9 : vector<128x8xi1> to vector<128x8xi32>
    %11 = arith.sitofp %10 : vector<128x8xi32> to vector<128x8xf32>
    %12 = vector.broadcast %4 : vector<128x1xi32> to vector<128x8xi32>
    %13 = arith.cmpi eq, %7, %12 : vector<128x8xi32>
    %14 = arith.extui %13 : vector<128x8xi1> to vector<128x8xi32>
    %15 = arith.sitofp %14 : vector<128x8xi32> to vector<128x8xf32>
    %16 = vector.broadcast %5 : vector<128x1xi32> to vector<128x8xi32>
    %17 = arith.cmpi eq, %6, %16 : vector<128x8xi32>
    %18 = arith.extui %17 : vector<128x8xi1> to vector<128x8xi32>
    %19 = arith.sitofp %18 : vector<128x8xi32> to vector<128x8xf32>
    %c0_4 = arith.constant 0 : index
    %c0_5 = arith.constant 0 : index
    %20 = vector.load %arg7[%c0_4, %c0_5] : memref<8x128xf32, #tpu.memory_space<vmem>>, vector<8x128xf32>
    %cst = arith.constant dense<0.000000e+00> : vector<128x128xf32>
    %21 = tpu.matmul %11, %20, %cst {dimension_numbers = #tpu.dot_dimension_numbers<[1], [0], [0], [1], [0, 0, 1, 1], [], []>} : vector<128x8xf32>, vector<8x128xf32>, vector<128x128xf32> -> vector<128x128xf32>
    %c0_6 = arith.constant 0 : index
    %c0_7 = arith.constant 0 : index
    %22 = vector.load %arg8[%c0_6, %c0_7] : memref<8x128xf32, #tpu.memory_space<vmem>>, vector<8x128xf32>
    %cst_8 = arith.constant dense<0.000000e+00> : vector<128x128xf32>
    %23 = tpu.matmul %15, %22, %cst_8 {dimension_numbers = #tpu.dot_dimension_numbers<[1], [0], [0], [1], [0, 0, 1, 1], [], []>} : vector<128x8xf32>, vector<8x128xf32>, vector<128x128xf32> -> vector<128x128xf32>
    %24 = arith.addf %21, %23 : vector<128x128xf32>
    %c0_9 = arith.constant 0 : index
    %c0_10 = arith.constant 0 : index
    %25 = vector.load %arg9[%c0_9, %c0_10] : memref<8x128xf32, #tpu.memory_space<vmem>>, vector<8x128xf32>
    %cst_11 = arith.constant dense<0.000000e+00> : vector<128x128xf32>
    %26 = tpu.matmul %19, %25, %cst_11 {dimension_numbers = #tpu.dot_dimension_numbers<[1], [0], [0], [1], [0, 0, 1, 1], [], []>} : vector<128x8xf32>, vector<8x128xf32>, vector<128x128xf32> -> vector<128x128xf32>
    %27 = arith.addf %24, %26 : vector<128x128xf32>
    %c0_12 = arith.constant 0 : index
    %c0_13 = arith.constant 0 : index
    %28 = vector.load %arg5[%c0_12, %c0_13] : memref<1x128xf32, #tpu.memory_space<vmem>>, vector<1x128xf32>
    %29 = vector.broadcast %28 : vector<1x128xf32> to vector<128x128xf32>
    %30 = arith.addf %27, %29 : vector<128x128xf32>
    %cst_14 = arith.constant 0.000000e+00 : f32
    %31 = vector.broadcast %cst_14 : f32 to vector<128x128xf32>
    %32 = arith.maximumf %30, %31 : vector<128x128xf32>
    %c0_15 = arith.constant 0 : index
    %c0_16 = arith.constant 0 : index
    %33 = vector.load %arg6[%c0_15, %c0_16] : memref<128x128xf32, #tpu.memory_space<vmem>>, vector<128x128xf32>
    tpu.vector_store %arg6[%c0_15, %c0_16], %32 {strides = array<i32>} : memref<128x128xf32, #tpu.memory_space<vmem>>, vector<128x128xf32>,
    return
  }
  func.func @transform_0(%arg0: i32) -> (i32, i32) {
    %c0_i32 = arith.constant 0 : i32
    %c0_i32_0 = arith.constant 0 : i32
    return %arg0, %c0_i32 : i32, i32
  }
  func.func @transform_1(%arg0: i32) -> (i32, i32) {
    %c0_i32 = arith.constant 0 : i32
    %c0_i32_0 = arith.constant 0 : i32
    %c0_i32_1 = arith.constant 0 : i32
    return %c0_i32, %c0_i32_0 : i32, i32
  }
  func.func @transform_2(%arg0: i32) -> (i32, i32) {
    %c0_i32 = arith.constant 0 : i32
    %c0_i32_0 = arith.constant 0 : i32
    %c0_i32_1 = arith.constant 0 : i32
    return %c0_i32, %c0_i32_0 : i32, i32
  }
  func.func @transform_3(%arg0: i32) -> (i32, i32, i32) {
    %c0_i32 = arith.constant 0 : i32
    %c0_i32_0 = arith.constant 0 : i32
    %c0_i32_1 = arith.constant 0 : i32
    %c0_i32_2 = arith.constant 0 : i32
    return %c0_i32, %c0_i32_0, %c0_i32_1 : i32, i32, i32
  }
  func.func @transform_4(%arg0: i32) -> (i32, i32) {
    %c0_i32 = arith.constant 0 : i32
    %c0_i32_0 = arith.constant 0 : i32
    %c0_i32_1 = arith.constant 0 : i32
    return %c0_i32, %c0_i32_0 : i32, i32
  }
  func.func @transform_5(%arg0: i32) -> (i32, i32) {
    %c0_i32 = arith.constant 0 : i32
    %c0_i32_0 = arith.constant 0 : i32
    return %arg0, %c0_i32 : i32, i32
  }
}

</mosaic_0001>

<llo_original>
// kernel: phrase_inference.1
$region0: #{phrase_inference.1}
  #allocation0 [shape = 'u32[]', space=smem, size = 0x4, offset = 0x4, fixed_abs, tag = 'smem constant byte address 0x4 - core index']
  #allocation1 [shape = 'u32[144,128]{1,0:T(1,128)}', space=vmem, size = 0x12000, scoped, tag = 'internal scratch']
  #allocation2 [shape = 'f32[8,128]{1,0:T(8,128)}', space=vmem, size = 0x1000, scoped, tag = 'scratch operand']
  #allocation3 [shape = 'f32[8,128]{1,0:T(8,128)}', space=vmem, size = 0x1000, scoped, tag = 'scratch operand']
  #allocation4 [shape = 'f32[8,128]{1,0:T(8,128)}', space=vmem, size = 0x1000, scoped, tag = 'scratch operand']
  %s0 = inlined_call_operand.vmem [shape: s32[128,3], index: 0, kind: input, shape index: {}]
  %s1 = inlined_call_operand.vmem [shape: f32[8,128], index: 1, kind: input, shape index: {}]
  %s2 = inlined_call_operand.vmem [shape: f32[8,128], index: 2, kind: input, shape index: {}]
  %s3 = inlined_call_operand.vmem [shape: f32[3,128,128], index: 3, kind: input, shape index: {}]
  %s4 = inlined_call_operand.vmem [shape: f32[1,128], index: 4, kind: input, shape index: {}]
  %s5 = inlined_call_operand.vmem [shape: f32[128,128], index: 5, kind: output, shape index: {}]
  %s6 = sld [smem:[#allocation0]]
  $region34: #{phrase_inference.1} parent=0
    _
  %s8 = ssub.s32 1, %s6
  %s9 = scalar_select 0, %s8, %s6
  // Predicated region
  $region2: #{phrase_inference.1} parent=0 // pred_check
    _
  $region3: #{phrase_inference.1} parent=0 // pred_check_branch
    %11 = sbr.rel (0) target = $region5
  $region4: #{phrase_inference.1} parent=0 // pred_region
    _
  $region5: #{phrase_inference.1} parent=0 // pred_fallthru
    _
  // Predicated region
  $region6: #{phrase_inference.1} parent=0 // pred_check
    _
  $region7: #{phrase_inference.1} parent=0 // pred_check_branch
    %13 = sbr.rel (0) target = $region9
  $region8: #{phrase_inference.1} parent=0 // pred_region
    _
  $region9: #{phrase_inference.1} parent=0 // pred_fallthru
    _
  // Predicated region
  $region10: #{phrase_inference.1} parent=0 // pred_check
    _
  $region11: #{phrase_inference.1} parent=0 // pred_check_branch
    %15 = sbr.rel (0) target = $region13
  $region12: #{phrase_inference.1} parent=0 // pred_region
    _
  $region13: #{phrase_inference.1} parent=0 // pred_fallthru
    _
  // Predicated region
  $region14: #{phrase_inference.1} parent=0 // pred_check
    _
  $region15: #{phrase_inference.1} parent=0 // pred_check_branch
    %17 = sbr.rel (0) target = $region17
  $region16: #{phrase_inference.1} parent=0 // pred_region
    _
  $region17: #{phrase_inference.1} parent=0 // pred_fallthru
    _
  // Predicated region
  $region18: #{phrase_inference.1} parent=0 // pred_check
    _
  $region19: #{phrase_inference.1} parent=0 // pred_check_branch
    %19 = sbr.rel (0) target = $region21
  $region20: #{phrase_inference.1} parent=0 // pred_region
    _
  $region21: #{phrase_inference.1} parent=0 // pred_fallthru
    _
  %p20 = scmp.eq.s32.totalorder 0, 0
  // Predicated region
  $region22: #{phrase_inference.1} parent=0 // pred_check
    %p21 = pneg %p20
  $region23: #{phrase_inference.1} parent=0 // pred_check_branch
    %23 = sbr.rel (%p21) target = $region25
  $region24: #{phrase_inference.1} parent=0 // pred_region
    %v24 = vld [vmem:[%s1] sm:$0xff]
    %v25 = vld [vmem:[%s3] sm:$0xff]
    %v26 = vld [vmem:[%s3 + $0x8] sm:$0xff]
    %v27 = vld [vmem:[%s3 + $0x10] sm:$0xff]
    %v28 = vld [vmem:[%s3 + $0x18] sm:$0xff]
    %v29 = vld [vmem:[%s3 + $0x20] sm:$0xff]
    %v30 = vld [vmem:[%s3 + $0x28] sm:$0xff]
    %v31 = vld [vmem:[%s3 + $0x30] sm:$0xff]
    %v32 = vld [vmem:[%s3 + $0x38] sm:$0xff]
    %v33 = vld [vmem:[%s3 + $0x40] sm:$0xff]
    %v34 = vld [vmem:[%s3 + $0x48] sm:$0xff]
    %v35 = vld [vmem:[%s3 + $0x50] sm:$0xff]
    %v36 = vld [vmem:[%s3 + $0x58] sm:$0xff]
    %v37 = vld [vmem:[%s3 + $0x60] sm:$0xff]
    %v38 = vld [vmem:[%s3 + $0x68] sm:$0xff]
    %v39 = vld [vmem:[%s3 + $0x70] sm:$0xff]
    %v40 = vld [vmem:[%s3 + $0x78] sm:$0xff]
    %41 = vmatprep.subr.mxu0 0.0
    %42 = vmatpush1.msra.mxu0 %v40
    %43 = vmatprep.subr.mxu0 0.0
    %44 = vmatpush1.msra.mxu0 %v39
    %45 = vmatprep.subr.mxu0 0.0
    %46 = vmatpush1.msra.mxu0 %v38
    %47 = vmatprep.subr.mxu0 0.0
    %48 = vmatpush1.msra.mxu0 %v37
    %49 = vmatprep.subr.mxu0 0.0
    %50 = vmatpush1.msra.mxu0 %v36
    %51 = vmatprep.subr.mxu0 0.0
    %52 = vmatpush1.msra.mxu0 %v35
    %53 = vmatprep.subr.mxu0 0.0
    %54 = vmatpush1.msra.mxu0 %v34
    %55 = vmatprep.subr.mxu0 0.0
    %56 = vmatpush1.msra.mxu0 %v33
    %57 = vmatprep.subr.mxu0 0.0
    %58 = vmatpush1.msra.mxu0 %v32
    %59 = vmatprep.subr.mxu0 0.0
    %60 = vmatpush1.msra.mxu0 %v31
    %61 = vmatprep.subr.mxu0 0.0
    %62 = vmatpush1.msra.mxu0 %v30
    %63 = vmatprep.subr.mxu0 0.0
    %64 = vmatpush1.msra.mxu0 %v29
    %65 = vmatprep.subr.mxu0 0.0
    %66 = vmatpush1.msra.mxu0 %v28
    %67 = vmatprep.subr.mxu0 0.0
    %68 = vmatpush1.msra.mxu0 %v27
    %69 = vmatprep.subr.mxu0 0.0
    %70 = vmatpush1.msra.mxu0 %v26
    %71 = vmatprep.subr.mxu0 0.0
    %72 = vmatpush1.msra.mxu0 %v25
    %73 = vmatprep.subr.mxu0 0.0
    %74 = vmatpush2.msra.mxu0 0.0
    %75 = vmatprep.subr.mxu0 0.0
    %76 = vmatpush2.msra.mxu0 0.0
    %77 = vmatprep.subr.mxu0 0.0
    %78 = vmatpush2.msra.mxu0 0.0
    %79 = vmatprep.subr.mxu0 0.0
    %80 = vmatpush2.msra.mxu0 0.0
    %81 = vmatprep.subr.mxu0 0.0
    %82 = vmatpush2.msra.mxu0 0.0
    %83 = vmatprep.subr.mxu0 0.0
    %84 = vmatpush2.msra.mxu0 0.0
    %85 = vmatprep.subr.mxu0 0.0
    %86 = vmatpush2.msra.mxu0 0.0
    %87 = vmatprep.subr.mxu0 0.0
    %88 = vmatpush2.msra.mxu0 0.0
    %89 = vmatprep.subr.mxu0 0.0
    %90 = vmatpush2.msra.mxu0 0.0
    %91 = vmatprep.subr.mxu0 0.0
    %92 = vmatpush2.msra.mxu0 0.0
    %93 = vmatprep.subr.mxu0 0.0
    %94 = vmatpush2.msra.mxu0 0.0
    %95 = vmatprep.subr.mxu0 0.0
    %96 = vmatpush2.msra.mxu0 0.0
    %97 = vmatprep.subr.mxu0 0.0
    %98 = vmatpush2.msra.mxu0 0.0
    %99 = vmatprep.subr.mxu0 0.0
    %100 = vmatpush2.msra.mxu0 0.0
    %101 = vmatprep.subr.mxu0 0.0
    %102 = vmatpush2.msra.mxu0 0.0
    %103 = vmatprep.subr.mxu0 0.0
    %104 = vmatpush2.msra.mxu0 0.0
    %105 = vmatprep.mubr.f32.mxu0 0.0
    %106 = vmatmul.mubr.f32.gmra.mxu0 %v24
    %v107 = vpop.f32.mrf.mxu0
    %v108 = vadd.f32 0.0, %v107
    %v109 = vpop.f32.mrf.mxu0
    %110 = vdwg.mxu0
    %111 = vst [vmem:[#allocation2] sm:$0xff] %v108
    %v112 = vld [vmem:[%s2] sm:$0xff]
    %s113 = scalar_lea.vmem %s3, 128
    %v114 = vld [vmem:[%s113] sm:$0xff]
    %v115 = vld [vmem:[%s113 + $0x8] sm:$0xff]
    %v116 = vld [vmem:[%s113 + $0x10] sm:$0xff]
    %v117 = vld [vmem:[%s113 + $0x18] sm:$0xff]
    %v118 = vld [vmem:[%s113 + $0x20] sm:$0xff]
    %v119 = vld [vmem:[%s113 + $0x28] sm:$0xff]
    %v120 = vld [vmem:[%s113 + $0x30] sm:$0xff]
    %v121 = vld [vmem:[%s113 + $0x38] sm:$0xff]
    %v122 = vld [vmem:[%s113 + $0x40] sm:$0xff]
    %v123 = vld [vmem:[%s113 + $0x48] sm:$0xff]
    %v124 = vld [vmem:[%s113 + $0x50] sm:$0xff]
    %v125 = vld [vmem:[%s113 + $0x58] sm:$0xff]
    %v126 = vld [vmem:[%s113 + $0x60] sm:$0xff]
    %v127 = vld [vmem:[%s113 + $0x68] sm:$0xff]
    %v128 = vld [vmem:[%s113 + $0x70] sm:$0xff]
    %v129 = vld [vmem:[%s113 + $0x78] sm:$0xff]
    %130 = vmatprep.subr.mxu0 0.0
    %131 = vmatpush1.msra.mxu0 %v129
    %132 = vmatprep.subr.mxu0 0.0
    %133 = vmatpush1.msra.mxu0 %v128
    %134 = vmatprep.subr.mxu0 0.0
    %135 = vmatpush1.msra.mxu0 %v127
    %136 = vmatprep.subr.mxu0 0.0
    %137 = vmatpush1.msra.mxu0 %v126
    %138 = vmatprep.subr.mxu0 0.0
    %139 = vmatpush1.msra.mxu0 %v125
    %140 = vmatprep.subr.mxu0 0.0
    %141 = vmatpush1.msra.mxu0 %v124
    %142 = vmatprep.subr.mxu0 0.0
    %143 = vmatpush1.msra.mxu0 %v123
    %144 = vmatprep.subr.mxu0 0.0
    %145 = vmatpush1.msra.mxu0 %v122
    %146 = vmatprep.subr.mxu0 0.0
    %147 = vmatpush1.msra.mxu0 %v121
    %148 = vmatprep.subr.mxu0 0.0
    %149 = vmatpush1.msra.mxu0 %v120
    %150 = vmatprep.subr.mxu0 0.0
    %151 = vmatpush1.msra.mxu0 %v119
    %152 = vmatprep.subr.mxu0 0.0
    %153 = vmatpush1.msra.mxu0 %v118
    %154 = vmatprep.subr.mxu0 0.0
    %155 = vmatpush1.msra.mxu0 %v117
    %156 = vmatprep.subr.mxu0 0.0
    %157 = vmatpush1.msra.mxu0 %v116
    %158 = vmatprep.subr.mxu0 0.0
    %159 = vmatpush1.msra.mxu0 %v115
    %160 = vmatprep.subr.mxu0 0.0
    %161 = vmatpush1.msra.mxu0 %v114
    %162 = vmatprep.subr.mxu0 0.0
    %163 = vmatpush2.msra.mxu0 0.0
    %164 = vmatprep.subr.mxu0 0.0
    %165 = vmatpush2.msra.mxu0 0.0
    %166 = vmatprep.subr.mxu0 0.0
    %167 = vmatpush2.msra.mxu0 0.0
    %168 = vmatprep.subr.mxu0 0.0
    %169 = vmatpush2.msra.mxu0 0.0
    %170 = vmatprep.subr.mxu0 0.0
    %171 = vmatpush2.msra.mxu0 0.0
    %172 = vmatprep.subr.mxu0 0.0
    %173 = vmatpush2.msra.mxu0 0.0
    %174 = vmatprep.subr.mxu0 0.0
    %175 = vmatpush2.msra.mxu0 0.0
    %176 = vmatprep.subr.mxu0 0.0
    %177 = vmatpush2.msra.mxu0 0.0
    %178 = vmatprep.subr.mxu0 0.0
    %179 = vmatpush2.msra.mxu0 0.0
    %180 = vmatprep.subr.mxu0 0.0
    %181 = vmatpush2.msra.mxu0 0.0
    %182 = vmatprep.subr.mxu0 0.0
    %183 = vmatpush2.msra.mxu0 0.0
    %184 = vmatprep.subr.mxu0 0.0
    %185 = vmatpush2.msra.mxu0 0.0
    %186 = vmatprep.subr.mxu0 0.0
    %187 = vmatpush2.msra.mxu0 0.0
    %188 = vmatprep.subr.mxu0 0.0
    %189 = vmatpush2.msra.mxu0 0.0
    %190 = vmatprep.subr.mxu0 0.0
    %191 = vmatpush2.msra.mxu0 0.0
    %192 = vmatprep.subr.mxu0 0.0
    %193 = vmatpush2.msra.mxu0 0.0
    %194 = vmatprep.mubr.f32.mxu0 0.0
    %195 = vmatmul.mubr.f32.gmra.mxu0 %v112
    %v196 = vpop.f32.mrf.mxu0
    %v197 = vadd.f32 0.0, %v196
    %v198 = vpop.f32.mrf.mxu0
    %199 = vdwg.mxu0
    %200 = vst [vmem:[#allocation3] sm:$0xff] %v197
    %v201 = vld [vmem:[%s1] sm:$0xff]
    %s202 = scalar_lea.vmem %s3, 256
    %v203 = vld [vmem:[%s202] sm:$0xff]
    %v204 = vld [vmem:[%s202 + $0x8] sm:$0xff]
    %v205 = vld [vmem:[%s202 + $0x10] sm:$0xff]
    %v206 = vld [vmem:[%s202 + $0x18] sm:$0xff]
    %v207 = vld [vmem:[%s202 + $0x20] sm:$0xff]
    %v208 = vld [vmem:[%s202 + $0x28] sm:$0xff]
    %v209 = vld [vmem:[%s202 + $0x30] sm:$0xff]
    %v210 = vld [vmem:[%s202 + $0x38] sm:$0xff]
    %v211 = vld [vmem:[%s202 + $0x40] sm:$0xff]
    %v212 = vld [vmem:[%s202 + $0x48] sm:$0xff]
    %v213 = vld [vmem:[%s202 + $0x50] sm:$0xff]
    %v214 = vld [vmem:[%s202 + $0x58] sm:$0xff]
    %v215 = vld [vmem:[%s202 + $0x60] sm:$0xff]
    %v216 = vld [vmem:[%s202 + $0x68] sm:$0xff]
    %v217 = vld [vmem:[%s202 + $0x70] sm:$0xff]
    %v218 = vld [vmem:[%s202 + $0x78] sm:$0xff]
    %219 = vmatprep.subr.mxu0 0.0
    %220 = vmatpush1.msra.mxu0 %v218
    %221 = vmatprep.subr.mxu0 0.0
    %222 = vmatpush1.msra.mxu0 %v217
    %223 = vmatprep.subr.mxu0 0.0
    %224 = vmatpush1.msra.mxu0 %v216
    %225 = vmatprep.subr.mxu0 0.0
    %226 = vmatpush1.msra.mxu0 %v215
    %227 = vmatprep.subr.mxu0 0.0
    %228 = vmatpush1.msra.mxu0 %v214
    %229 = vmatprep.subr.mxu0 0.0
    %230 = vmatpush1.msra.mxu0 %v213
    %231 = vmatprep.subr.mxu0 0.0
    %232 = vmatpush1.msra.mxu0 %v212
    %233 = vmatprep.subr.mxu0 0.0
    %234 = vmatpush1.msra.mxu0 %v211
    %235 = vmatprep.subr.mxu0 0.0
    %236 = vmatpush1.msra.mxu0 %v210
    %237 = vmatprep.subr.mxu0 0.0
    %238 = vmatpush1.msra.mxu0 %v209
    %239 = vmatprep.subr.mxu0 0.0
    %240 = vmatpush1.msra.mxu0 %v208
    %241 = vmatprep.subr.mxu0 0.0
    %242 = vmatpush1.msra.mxu0 %v207
    %243 = vmatprep.subr.mxu0 0.0
    %244 = vmatpush1.msra.mxu0 %v206
    %245 = vmatprep.subr.mxu0 0.0
    %246 = vmatpush1.msra.mxu0 %v205
    %247 = vmatprep.subr.mxu0 0.0
    %248 = vmatpush1.msra.mxu0 %v204
    %249 = vmatprep.subr.mxu0 0.0
    %250 = vmatpush1.msra.mxu0 %v203
    %251 = vmatprep.subr.mxu0 0.0
    %252 = vmatpush2.msra.mxu0 0.0
    %253 = vmatprep.subr.mxu0 0.0
    %254 = vmatpush2.msra.mxu0 0.0
    %255 = vmatprep.subr.mxu0 0.0
    %256 = vmatpush2.msra.mxu0 0.0
    %257 = vmatprep.subr.mxu0 0.0
    %258 = vmatpush2.msra.mxu0 0.0
    %259 = vmatprep.subr.mxu0 0.0
    %260 = vmatpush2.msra.mxu0 0.0
    %261 = vmatprep.subr.mxu0 0.0
    %262 = vmatpush2.msra.mxu0 0.0
    %263 = vmatprep.subr.mxu0 0.0
    %264 = vmatpush2.msra.mxu0 0.0
    %265 = vmatprep.subr.mxu0 0.0
    %266 = vmatpush2.msra.mxu0 0.0
    %267 = vmatprep.subr.mxu0 0.0
    %268 = vmatpush2.msra.mxu0 0.0
    %269 = vmatprep.subr.mxu0 0.0
    %270 = vmatpush2.msra.mxu0 0.0
    %271 = vmatprep.subr.mxu0 0.0
    %272 = vmatpush2.msra.mxu0 0.0
    %273 = vmatprep.subr.mxu0 0.0
    %274 = vmatpush2.msra.mxu0 0.0
    %275 = vmatprep.subr.mxu0 0.0
    %276 = vmatpush2.msra.mxu0 0.0
    %277 = vmatprep.subr.mxu0 0.0
    %278 = vmatpush2.msra.mxu0 0.0
    %279 = vmatprep.subr.mxu0 0.0
    %280 = vmatpush2.msra.mxu0 0.0
    %281 = vmatprep.subr.mxu0 0.0
    %282 = vmatpush2.msra.mxu0 0.0
    %283 = vmatprep.mubr.f32.mxu0 0.0
    %284 = vmatmul.mubr.f32.gmra.mxu0 %v201
    %v285 = vpop.f32.mrf.mxu0
    %v286 = vadd.f32 0.0, %v285
    %v287 = vpop.f32.mrf.mxu0
    %288 = vdwg.mxu0
    %289 = vst [vmem:[#allocation4] sm:$0xff] %v286
  $region25: #{phrase_inference.1} parent=0 // pred_fallthru
    _
  %v290 = vld [vmem:[%s0] sm:$0xff]
  %v291 = vld [vmem:[%s0 + $0x8] sm:$0xff]
  %v292 = vld [vmem:[%s0 + $0x10] sm:$0xff]
  %v293 = vld [vmem:[%s0 + $0x18] sm:$0xff]
  %v294 = vld [vmem:[%s0 + $0x20] sm:$0xff]
  %v295 = vld [vmem:[%s0 + $0x28] sm:$0xff]
  %v296 = vld [vmem:[%s0 + $0x30] sm:$0xff]
  %v297 = vld [vmem:[%s0 + $0x38] sm:$0xff]
  %v298 = vld [vmem:[%s0 + $0x40] sm:$0xff]
  %v299 = vld [vmem:[%s0 + $0x48] sm:$0xff]
  %v300 = vld [vmem:[%s0 + $0x50] sm:$0xff]
  %v301 = vld [vmem:[%s0 + $0x58] sm:$0xff]
  %v302 = vld [vmem:[%s0 + $0x60] sm:$0xff]
  %v303 = vld [vmem:[%s0 + $0x68] sm:$0xff]
  %v304 = vld [vmem:[%s0 + $0x70] sm:$0xff]
  %v305 = vld [vmem:[%s0 + $0x78] sm:$0xff]
  %v306 = vlaneseq
  %v307 = vand.u32 %v306, 127
  %308 = vset.pattern.permute.xlu0 0
  %309 = vperm.xlu0 %308, %v290
  %v310 = vpop.permute.xlu0 %309
  %311 = vset.pattern.permute.xlu0 0
  %312 = vperm.xlu0 %311, %v291
  %v313 = vpop.permute.xlu0 %312
  %314 = vset.pattern.permute.xlu0 0
  %315 = vperm.xlu0 %314, %v292
  %v316 = vpop.permute.xlu0 %315
  %317 = vset.pattern.permute.xlu0 0
  %318 = vperm.xlu0 %317, %v293
  %v319 = vpop.permute.xlu0 %318
  %320 = vset.pattern.permute.xlu0 0
  %321 = vperm.xlu0 %320, %v294
  %v322 = vpop.permute.xlu0 %321
  %323 = vset.pattern.permute.xlu0 0
  %324 = vperm.xlu0 %323, %v295
  %v325 = vpop.permute.xlu0 %324
  %326 = vset.pattern.permute.xlu0 0
  %327 = vperm.xlu0 %326, %v296
  %v328 = vpop.permute.xlu0 %327
  %329 = vset.pattern.permute.xlu0 0
  %330 = vperm.xlu0 %329, %v297
  %v331 = vpop.permute.xlu0 %330
  %332 = vset.pattern.permute.xlu0 0
  %333 = vperm.xlu0 %332, %v298
  %v334 = vpop.permute.xlu0 %333
  %335 = vset.pattern.permute.xlu0 0
  %336 = vperm.xlu0 %335, %v299
  %v337 = vpop.permute.xlu0 %336
  %338 = vset.pattern.permute.xlu0 0
  %339 = vperm.xlu0 %338, %v300
  %v340 = vpop.permute.xlu0 %339
  %341 = vset.pattern.permute.xlu0 0
  %342 = vperm.xlu0 %341, %v301
  %v343 = vpop.permute.xlu0 %342
  %344 = vset.pattern.permute.xlu0 0
  %345 = vperm.xlu0 %344, %v302
  %v346 = vpop.permute.xlu0 %345
  %347 = vset.pattern.permute.xlu0 0
  %348 = vperm.xlu0 %347, %v303
  %v349 = vpop.permute.xlu0 %348
  %350 = vset.pattern.permute.xlu0 0
  %351 = vperm.xlu0 %350, %v304
  %v352 = vpop.permute.xlu0 %351
  %353 = vset.pattern.permute.xlu0 0
  %354 = vperm.xlu0 %353, %v305
  %v355 = vpop.permute.xlu0 %354
  %vm356 = vcmp.eq.s32.totalorder %v307, %v310
  %vm357 = vcmp.eq.s32.totalorder %v307, %v313
  %vm358 = vcmp.eq.s32.totalorder %v307, %v316
  %vm359 = vcmp.eq.s32.totalorder %v307, %v319
  %vm360 = vcmp.eq.s32.totalorder %v307, %v322
  %vm361 = vcmp.eq.s32.totalorder %v307, %v325
  %vm362 = vcmp.eq.s32.totalorder %v307, %v328
  %vm363 = vcmp.eq.s32.totalorder %v307, %v331
  %vm364 = vcmp.eq.s32.totalorder %v307, %v334
  %vm365 = vcmp.eq.s32.totalorder %v307, %v337
  %vm366 = vcmp.eq.s32.totalorder %v307, %v340
  %vm367 = vcmp.eq.s32.totalorder %v307, %v343
  %vm368 = vcmp.eq.s32.totalorder %v307, %v346
  %vm369 = vcmp.eq.s32.totalorder %v307, %v349
  %vm370 = vcmp.eq.s32.totalorder %v307, %v352
  %vm371 = vcmp.eq.s32.totalorder %v307, %v355
  %v372 = vsel %vm356, 1, 0
  %v373 = vsel %vm357, 1, 0
  %v374 = vsel %vm358, 1, 0
  %v375 = vsel %vm359, 1, 0
  %v376 = vsel %vm360, 1, 0
  %v377 = vsel %vm361, 1, 0
  %v378 = vsel %vm362, 1, 0
  %v379 = vsel %vm363, 1, 0
  %v380 = vsel %vm364, 1, 0
  %v381 = vsel %vm365, 1, 0
  %v382 = vsel %vm366, 1, 0
  %v383 = vsel %vm367, 1, 0
  %v384 = vsel %vm368, 1, 0
  %v385 = vsel %vm369, 1, 0
  %v386 = vsel %vm370, 1, 0
  %v387 = vsel %vm371, 1, 0
  %v388 = vcvt.s32.f32 %v372
  %v389 = vcvt.s32.f32 %v373
  %v390 = vcvt.s32.f32 %v374
  %v391 = vcvt.s32.f32 %v375
  %v392 = vcvt.s32.f32 %v376
  %v393 = vcvt.s32.f32 %v377
  %v394 = vcvt.s32.f32 %v378
  %v395 = vcvt.s32.f32 %v379
  %v396 = vcvt.s32.f32 %v380
  %v397 = vcvt.s32.f32 %v381
  %v398 = vcvt.s32.f32 %v382
  %v399 = vcvt.s32.f32 %v383
  %v400 = vcvt.s32.f32 %v384
  %v401 = vcvt.s32.f32 %v385
  %v402 = vcvt.s32.f32 %v386
  %v403 = vcvt.s32.f32 %v387
  %404 = vset.pattern.permute.xlu0 1
  %405 = vperm.xlu0 %404, %v290
  %v406 = vpop.permute.xlu0 %405
  %407 = vset.pattern.permute.xlu0 1
  %408 = vperm.xlu0 %407, %v291
  %v409 = vpop.permute.xlu0 %408
  %410 = vset.pattern.permute.xlu0 1
  %411 = vperm.xlu0 %410, %v292
  %v412 = vpop.permute.xlu0 %411
  %413 = vset.pattern.permute.xlu0 1
  %414 = vperm.xlu0 %413, %v293
  %v415 = vpop.permute.xlu0 %414
  %416 = vset.pattern.permute.xlu0 1
  %417 = vperm.xlu0 %416, %v294
  %v418 = vpop.permute.xlu0 %417
  %419 = vset.pattern.permute.xlu0 1
  %420 = vperm.xlu0 %419, %v295
  %v421 = vpop.permute.xlu0 %420
  %422 = vset.pattern.permute.xlu0 1
  %423 = vperm.xlu0 %422, %v296
  %v424 = vpop.permute.xlu0 %423
  %425 = vset.pattern.permute.xlu0 1
  %426 = vperm.xlu0 %425, %v297
  %v427 = vpop.permute.xlu0 %426
  %428 = vset.pattern.permute.xlu0 1
  %429 = vperm.xlu0 %428, %v298
  %v430 = vpop.permute.xlu0 %429
  %431 = vset.pattern.permute.xlu0 1
  %432 = vperm.xlu0 %431, %v299
  %v433 = vpop.permute.xlu0 %432
  %434 = vset.pattern.permute.xlu0 1
  %435 = vperm.xlu0 %434, %v300
  %v436 = vpop.permute.xlu0 %435
  %437 = vset.pattern.permute.xlu0 1
  %438 = vperm.xlu0 %437, %v301
  %v439 = vpop.permute.xlu0 %438
  %440 = vset.pattern.permute.xlu0 1
  %441 = vperm.xlu0 %440, %v302
  %v442 = vpop.permute.xlu0 %441
  %443 = vset.pattern.permute.xlu0 1
  %444 = vperm.xlu0 %443, %v303
  %v445 = vpop.permute.xlu0 %444
  %446 = vset.pattern.permute.xlu0 1
  %447 = vperm.xlu0 %446, %v304
  %v448 = vpop.permute.xlu0 %447
  %449 = vset.pattern.permute.xlu0 1
  %450 = vperm.xlu0 %449, %v305
  %v451 = vpop.permute.xlu0 %450
  %vm452 = vcmp.eq.s32.totalorder %v307, %v406
  %vm453 = vcmp.eq.s32.totalorder %v307, %v409
  %vm454 = vcmp.eq.s32.totalorder %v307, %v412
  %vm455 = vcmp.eq.s32.totalorder %v307, %v415
  %vm456 = vcmp.eq.s32.totalorder %v307, %v418
  %vm457 = vcmp.eq.s32.totalorder %v307, %v421
  %vm458 = vcmp.eq.s32.totalorder %v307, %v424
  %vm459 = vcmp.eq.s32.totalorder %v307, %v427
  %vm460 = vcmp.eq.s32.totalorder %v307, %v430
  %vm461 = vcmp.eq.s32.totalorder %v307, %v433
  %vm462 = vcmp.eq.s32.totalorder %v307, %v436
  %vm463 = vcmp.eq.s32.totalorder %v307, %v439
  %vm464 = vcmp.eq.s32.totalorder %v307, %v442
  %vm465 = vcmp.eq.s32.totalorder %v307, %v445
  %vm466 = vcmp.eq.s32.totalorder %v307, %v448
  %vm467 = vcmp.eq.s32.totalorder %v307, %v451
  %v468 = vsel %vm452, 1, 0
  %v469 = vsel %vm453, 1, 0
  %v470 = vsel %vm454, 1, 0
  %v471 = vsel %vm455, 1, 0
  %v472 = vsel %vm456, 1, 0
  %v473 = vsel %vm457, 1, 0
  %v474 = vsel %vm458, 1, 0
  %v475 = vsel %vm459, 1, 0
  %v476 = vsel %vm460, 1, 0
  %v477 = vsel %vm461, 1, 0
  %v478 = vsel %vm462, 1, 0
  %v479 = vsel %vm463, 1, 0
  %v480 = vsel %vm464, 1, 0
  %v481 = vsel %vm465, 1, 0
  %v482 = vsel %vm466, 1, 0
  %v483 = vsel %vm467, 1, 0
  %v484 = vcvt.s32.f32 %v468
  %v485 = vcvt.s32.f32 %v469
  %v486 = vcvt.s32.f32 %v470
  %v487 = vcvt.s32.f32 %v471
  %v488 = vcvt.s32.f32 %v472
  %v489 = vcvt.s32.f32 %v473
  %v490 = vcvt.s32.f32 %v474
  %v491 = vcvt.s32.f32 %v475
  %v492 = vcvt.s32.f32 %v476
  %v493 = vcvt.s32.f32 %v477
  %v494 = vcvt.s32.f32 %v478
  %v495 = vcvt.s32.f32 %v479
  %v496 = vcvt.s32.f32 %v480
  %v497 = vcvt.s32.f32 %v481
  %v498 = vcvt.s32.f32 %v482
  %v499 = vcvt.s32.f32 %v483
  %500 = vset.pattern.permute.xlu0 2
  %501 = vperm.xlu0 %500, %v290
  %v502 = vpop.permute.xlu0 %501
  %503 = vset.pattern.permute.xlu0 2
  %504 = vperm.xlu0 %503, %v291
  %v505 = vpop.permute.xlu0 %504
  %506 = vset.pattern.permute.xlu0 2
  %507 = vperm.xlu0 %506, %v292
  %v508 = vpop.permute.xlu0 %507
  %509 = vset.pattern.permute.xlu0 2
  %510 = vperm.xlu0 %509, %v293
  %v511 = vpop.permute.xlu0 %510
  %512 = vset.pattern.permute.xlu0 2
  %513 = vperm.xlu0 %512, %v294
  %v514 = vpop.permute.xlu0 %513
  %515 = vset.pattern.permute.xlu0 2
  %516 = vperm.xlu0 %515, %v295
  %v517 = vpop.permute.xlu0 %516
  %518 = vset.pattern.permute.xlu0 2
  %519 = vperm.xlu0 %518, %v296
  %v520 = vpop.permute.xlu0 %519
  %521 = vset.pattern.permute.xlu0 2
  %522 = vperm.xlu0 %521, %v297
  %v523 = vpop.permute.xlu0 %522
  %524 = vset.pattern.permute.xlu0 2
  %525 = vperm.xlu0 %524, %v298
  %v526 = vpop.permute.xlu0 %525
  %527 = vset.pattern.permute.xlu0 2
  %528 = vperm.xlu0 %527, %v299
  %v529 = vpop.permute.xlu0 %528
  %530 = vset.pattern.permute.xlu0 2
  %531 = vperm.xlu0 %530, %v300
  %v532 = vpop.permute.xlu0 %531
  %533 = vset.pattern.permute.xlu0 2
  %534 = vperm.xlu0 %533, %v301
  %v535 = vpop.permute.xlu0 %534
  %536 = vset.pattern.permute.xlu0 2
  %537 = vperm.xlu0 %536, %v302
  %v538 = vpop.permute.xlu0 %537
  %539 = vset.pattern.permute.xlu0 2
  %540 = vperm.xlu0 %539, %v303
  %v541 = vpop.permute.xlu0 %540
  %542 = vset.pattern.permute.xlu0 2
  %543 = vperm.xlu0 %542, %v304
  %v544 = vpop.permute.xlu0 %543
  %545 = vset.pattern.permute.xlu0 2
  %546 = vperm.xlu0 %545, %v305
  %v547 = vpop.permute.xlu0 %546
  %vm548 = vcmp.eq.s32.totalorder %v307, %v502
  %vm549 = vcmp.eq.s32.totalorder %v307, %v505
  %vm550 = vcmp.eq.s32.totalorder %v307, %v508
  %vm551 = vcmp.eq.s32.totalorder %v307, %v511
  %vm552 = vcmp.eq.s32.totalorder %v307, %v514
  %vm553 = vcmp.eq.s32.totalorder %v307, %v517
  %vm554 = vcmp.eq.s32.totalorder %v307, %v520
  %vm555 = vcmp.eq.s32.totalorder %v307, %v523
  %vm556 = vcmp.eq.s32.totalorder %v307, %v526
  %vm557 = vcmp.eq.s32.totalorder %v307, %v529
  %vm558 = vcmp.eq.s32.totalorder %v307, %v532
  %vm559 = vcmp.eq.s32.totalorder %v307, %v535
  %vm560 = vcmp.eq.s32.totalorder %v307, %v538
  %vm561 = vcmp.eq.s32.totalorder %v307, %v541
  %vm562 = vcmp.eq.s32.totalorder %v307, %v544
  %vm563 = vcmp.eq.s32.totalorder %v307, %v547
  %v564 = vsel %vm548, 1, 0
  %v565 = vsel %vm549, 1, 0
  %v566 = vsel %vm550, 1, 0
  %v567 = vsel %vm551, 1, 0
  %v568 = vsel %vm552, 1, 0
  %v569 = vsel %vm553, 1, 0
  %v570 = vsel %vm554, 1, 0
  %v571 = vsel %vm555, 1, 0
  %v572 = vsel %vm556, 1, 0
  %v573 = vsel %vm557, 1, 0
  %v574 = vsel %vm558, 1, 0
  %v575 = vsel %vm559, 1, 0
  %v576 = vsel %vm560, 1, 0
  %v577 = vsel %vm561, 1, 0
  %v578 = vsel %vm562, 1, 0
  %v579 = vsel %vm563, 1, 0
  %v580 = vcvt.s32.f32 %v564
  %v581 = vcvt.s32.f32 %v565
  %v582 = vcvt.s32.f32 %v566
  %v583 = vcvt.s32.f32 %v567
  %v584 = vcvt.s32.f32 %v568
  %v585 = vcvt.s32.f32 %v569
  %v586 = vcvt.s32.f32 %v570
  %v587 = vcvt.s32.f32 %v571
  %v588 = vcvt.s32.f32 %v572
  %v589 = vcvt.s32.f32 %v573
  %v590 = vcvt.s32.f32 %v574
  %v591 = vcvt.s32.f32 %v575
  %v592 = vcvt.s32.f32 %v576
  %v593 = vcvt.s32.f32 %v577
  %v594 = vcvt.s32.f32 %v578
  %v595 = vcvt.s32.f32 %v579
  %v596 = vld [vmem:[#allocation2] sm:$0xff]
  %v597 = vld [vmem:[#allocation3] sm:$0xff]
  %vm598 = vcmask 64512
  %v600 = vsel %vm598, %v484, 0
  %v603 = vsel %vm598, %v485, 0
  %v606 = vsel %vm598, %v486, 0
  %v609 = vsel %vm598, %v487, 0
  %v612 = vsel %vm598, %v488, 0
  %v615 = vsel %vm598, %v489, 0
  %v618 = vsel %vm598, %v490, 0
  %v621 = vsel %vm598, %v491, 0
  %v624 = vsel %vm598, %v492, 0
  %v627 = vsel %vm598, %v493, 0
  %v630 = vsel %vm598, %v494, 0
  %v633 = vsel %vm598, %v495, 0
  %v636 = vsel %vm598, %v496, 0
  %v639 = vsel %vm598, %v497, 0
  %v642 = vsel %vm598, %v498, 0
  %v645 = vsel %vm598, %v499, 0
  %647 = vmatprep.subr.mxu0 0.0
  %648 = vmatpush1.msra.mxu0 0.0
  %649 = vmatprep.subr.mxu0 0.0
  %650 = vmatpush1.msra.mxu0 0.0
  %651 = vmatprep.subr.mxu0 0.0
  %652 = vmatpush1.msra.mxu0 0.0
  %653 = vmatprep.subr.mxu0 0.0
  %654 = vmatpush1.msra.mxu0 0.0
  %655 = vmatprep.subr.mxu0 0.0
  %656 = vmatpush1.msra.mxu0 0.0
  %657 = vmatprep.subr.mxu0 0.0
  %658 = vmatpush1.msra.mxu0 0.0
  %659 = vmatprep.subr.mxu0 0.0
  %660 = vmatpush1.msra.mxu0 0.0
  %661 = vmatprep.subr.mxu0 0.0
  %662 = vmatpush1.msra.mxu0 0.0
  %663 = vmatprep.subr.mxu0 0.0
  %664 = vmatpush1.msra.mxu0 0.0
  %665 = vmatprep.subr.mxu0 0.0
  %666 = vmatpush1.msra.mxu0 0.0
  %667 = vmatprep.subr.mxu0 0.0
  %668 = vmatpush1.msra.mxu0 0.0
  %669 = vmatprep.subr.mxu0 0.0
  %670 = vmatpush1.msra.mxu0 0.0
  %671 = vmatprep.subr.mxu0 0.0
  %672 = vmatpush1.msra.mxu0 0.0
  %673 = vmatprep.subr.mxu0 0.0
  %674 = vmatpush1.msra.mxu0 0.0
  %675 = vmatprep.subr.mxu0 0.0
  %676 = vmatpush1.msra.mxu0 0.0
  %677 = vmatprep.subr.mxu0 0.0
  %678 = vmatpush1.msra.mxu0 %v597
  %679 = vmatprep.subr.mxu0 0.0
  %680 = vmatpush2.msra.mxu0 0.0
  %681 = vmatprep.subr.mxu0 0.0
  %682 = vmatpush2.msra.mxu0 0.0
  %683 = vmatprep.subr.mxu0 0.0
  %684 = vmatpush2.msra.mxu0 0.0
  %685 = vmatprep.subr.mxu0 0.0
  %686 = vmatpush2.msra.mxu0 0.0
  %687 = vmatprep.subr.mxu0 0.0
  %688 = vmatpush2.msra.mxu0 0.0
  %689 = vmatprep.subr.mxu0 0.0
  %690 = vmatpush2.msra.mxu0 0.0
  %691 = vmatprep.subr.mxu0 0.0
  %692 = vmatpush2.msra.mxu0 0.0
  %693 = vmatprep.subr.mxu0 0.0
  %694 = vmatpush2.msra.mxu0 0.0
  %695 = vmatprep.subr.mxu0 0.0
  %696 = vmatpush2.msra.mxu0 0.0
  %697 = vmatprep.subr.mxu0 0.0
  %698 = vmatpush2.msra.mxu0 0.0
  %699 = vmatprep.subr.mxu0 0.0
  %700 = vmatpush2.msra.mxu0 0.0
  %701 = vmatprep.subr.mxu0 0.0
  %702 = vmatpush2.msra.mxu0 0.0
  %703 = vmatprep.subr.mxu0 0.0
  %704 = vmatpush2.msra.mxu0 0.0
  %705 = vmatprep.subr.mxu0 0.0
  %706 = vmatpush2.msra.mxu0 0.0
  %707 = vmatprep.subr.mxu0 0.0
  %708 = vmatpush2.msra.mxu0 0.0
  %709 = vmatprep.subr.mxu0 0.0
  %710 = vmatpush2.msra.mxu0 0.0
  %711 = vmatprep.mubr.f32.mxu0 0.0
  %712 = vmatmul.mubr.f32.gmra.mxu0 %v600
  %v713 = vpop.f32.mrf.mxu0
  %v714 = vadd.f32 0.0, %v713
  %v715 = vpop.f32.mrf.mxu0
  %716 = vmatprep.mubr.f32.mxu0 0.0
  %717 = vmatmul.mubr.f32.gmra.mxu0 %v603
  %v718 = vpop.f32.mrf.mxu0
  %v719 = vadd.f32 0.0, %v718
  %v720 = vpop.f32.mrf.mxu0
  %721 = vmatprep.mubr.f32.mxu0 0.0
  %722 = vmatmul.mubr.f32.gmra.mxu0 %v606
  %v723 = vpop.f32.mrf.mxu0
  %v724 = vadd.f32 0.0, %v723
  %v725 = vpop.f32.mrf.mxu0
  %726 = vmatprep.mubr.f32.mxu0 0.0
  %727 = vmatmul.mubr.f32.gmra.mxu0 %v609
  %v728 = vpop.f32.mrf.mxu0
  %v729 = vadd.f32 0.0, %v728
  %v730 = vpop.f32.mrf.mxu0
  %731 = vmatprep.mubr.f32.mxu0 0.0
  %732 = vmatmul.mubr.f32.gmra.mxu0 %v612
  %v733 = vpop.f32.mrf.mxu0
  %v734 = vadd.f32 0.0, %v733
  %v735 = vpop.f32.mrf.mxu0
  %736 = vmatprep.mubr.f32.mxu0 0.0
  %737 = vmatmul.mubr.f32.gmra.mxu0 %v615
  %v738 = vpop.f32.mrf.mxu0
  %v739 = vadd.f32 0.0, %v738
  %v740 = vpop.f32.mrf.mxu0
  %741 = vmatprep.mubr.f32.mxu0 0.0
  %742 = vmatmul.mubr.f32.gmra.mxu0 %v618
  %v743 = vpop.f32.mrf.mxu0
  %v744 = vadd.f32 0.0, %v743
  %v745 = vpop.f32.mrf.mxu0
  %746 = vmatprep.mubr.f32.mxu0 0.0
  %747 = vmatmul.mubr.f32.gmra.mxu0 %v621
  %v748 = vpop.f32.mrf.mxu0
  %v749 = vadd.f32 0.0, %v748
  %v750 = vpop.f32.mrf.mxu0
  %751 = vmatprep.mubr.f32.mxu0 0.0
  %752 = vmatmul.mubr.f32.gmra.mxu0 %v624
  %v753 = vpop.f32.mrf.mxu0
  %v754 = vadd.f32 0.0, %v753
  %v755 = vpop.f32.mrf.mxu0
  %756 = vmatprep.mubr.f32.mxu0 0.0
  %757 = vmatmul.mubr.f32.gmra.mxu0 %v627
  %v758 = vpop.f32.mrf.mxu0
  %v759 = vadd.f32 0.0, %v758
  %v760 = vpop.f32.mrf.mxu0
  %761 = vmatprep.mubr.f32.mxu0 0.0
  %762 = vmatmul.mubr.f32.gmra.mxu0 %v630
  %v763 = vpop.f32.mrf.mxu0
  %v764 = vadd.f32 0.0, %v763
  %v765 = vpop.f32.mrf.mxu0
  %766 = vmatprep.mubr.f32.mxu0 0.0
  %767 = vmatmul.mubr.f32.gmra.mxu0 %v633
  %v768 = vpop.f32.mrf.mxu0
  %v769 = vadd.f32 0.0, %v768
  %v770 = vpop.f32.mrf.mxu0
  %771 = vmatprep.mubr.f32.mxu0 0.0
  %772 = vmatmul.mubr.f32.gmra.mxu0 %v636
  %v773 = vpop.f32.mrf.mxu0
  %v774 = vadd.f32 0.0, %v773
  %v775 = vpop.f32.mrf.mxu0
  %776 = vmatprep.mubr.f32.mxu0 0.0
  %777 = vmatmul.mubr.f32.gmra.mxu0 %v639
  %v778 = vpop.f32.mrf.mxu0
  %v779 = vadd.f32 0.0, %v778
  %v780 = vpop.f32.mrf.mxu0
  %781 = vmatprep.mubr.f32.mxu0 0.0
  %782 = vmatmul.mubr.f32.gmra.mxu0 %v642
  %v783 = vpop.f32.mrf.mxu0
  %v784 = vadd.f32 0.0, %v783
  %v785 = vpop.f32.mrf.mxu0
  %786 = vmatprep.mubr.f32.mxu0 0.0
  %787 = vmatmul.mubr.f32.gmra.mxu0 %v645
  %v788 = vpop.f32.mrf.mxu0
  %v789 = vadd.f32 0.0, %v788
  %v790 = vpop.f32.mrf.mxu0
  %791 = vdwg.mxu0
  %v793 = vsel %vm598, %v388, 0
  %v796 = vsel %vm598, %v389, 0
  %v799 = vsel %vm598, %v390, 0
  %v802 = vsel %vm598, %v391, 0
  %v805 = vsel %vm598, %v392, 0
  %v808 = vsel %vm598, %v393, 0
  %v811 = vsel %vm598, %v394, 0
  %v814 = vsel %vm598, %v395, 0
  %v817 = vsel %vm598, %v396, 0
  %v820 = vsel %vm598, %v397, 0
  %v823 = vsel %vm598, %v398, 0
  %v826 = vsel %vm598, %v399, 0
  %v829 = vsel %vm598, %v400, 0
  %v832 = vsel %vm598, %v401, 0
  %v835 = vsel %vm598, %v402, 0
  %v838 = vsel %vm598, %v403, 0
  %840 = vmatprep.subr.mxu0 0.0
  %841 = vmatpush1.msra.mxu0 0.0
  %842 = vmatprep.subr.mxu0 0.0
  %843 = vmatpush1.msra.mxu0 0.0
  %844 = vmatprep.subr.mxu0 0.0
  %845 = vmatpush1.msra.mxu0 0.0
  %846 = vmatprep.subr.mxu0 0.0
  %847 = vmatpush1.msra.mxu0 0.0
  %848 = vmatprep.subr.mxu0 0.0
  %849 = vmatpush1.msra.mxu0 0.0
  %850 = vmatprep.subr.mxu0 0.0
  %851 = vmatpush1.msra.mxu0 0.0
  %852 = vmatprep.subr.mxu0 0.0
  %853 = vmatpush1.msra.mxu0 0.0
  %854 = vmatprep.subr.mxu0 0.0
  %855 = vmatpush1.msra.mxu0 0.0
  %856 = vmatprep.subr.mxu0 0.0
  %857 = vmatpush1.msra.mxu0 0.0
  %858 = vmatprep.subr.mxu0 0.0
  %859 = vmatpush1.msra.mxu0 0.0
  %860 = vmatprep.subr.mxu0 0.0
  %861 = vmatpush1.msra.mxu0 0.0
  %862 = vmatprep.subr.mxu0 0.0
  %863 = vmatpush1.msra.mxu0 0.0
  %864 = vmatprep.subr.mxu0 0.0
  %865 = vmatpush1.msra.mxu0 0.0
  %866 = vmatprep.subr.mxu0 0.0
  %867 = vmatpush1.msra.mxu0 0.0
  %868 = vmatprep.subr.mxu0 0.0
  %869 = vmatpush1.msra.mxu0 0.0
  %870 = vmatprep.subr.mxu0 0.0
  %871 = vmatpush1.msra.mxu0 %v596
  %872 = vmatprep.subr.mxu0 0.0
  %873 = vmatpush2.msra.mxu0 0.0
  %874 = vmatprep.subr.mxu0 0.0
  %875 = vmatpush2.msra.mxu0 0.0
  %876 = vmatprep.subr.mxu0 0.0
  %877 = vmatpush2.msra.mxu0 0.0
  %878 = vmatprep.subr.mxu0 0.0
  %879 = vmatpush2.msra.mxu0 0.0
  %880 = vmatprep.subr.mxu0 0.0
  %881 = vmatpush2.msra.mxu0 0.0
  %882 = vmatprep.subr.mxu0 0.0
  %883 = vmatpush2.msra.mxu0 0.0
  %884 = vmatprep.subr.mxu0 0.0
  %885 = vmatpush2.msra.mxu0 0.0
  %886 = vmatprep.subr.mxu0 0.0
  %887 = vmatpush2.msra.mxu0 0.0
  %888 = vmatprep.subr.mxu0 0.0
  %889 = vmatpush2.msra.mxu0 0.0
  %890 = vmatprep.subr.mxu0 0.0
  %891 = vmatpush2.msra.mxu0 0.0
  %892 = vmatprep.subr.mxu0 0.0
  %893 = vmatpush2.msra.mxu0 0.0
  %894 = vmatprep.subr.mxu0 0.0
  %895 = vmatpush2.msra.mxu0 0.0
  %896 = vmatprep.subr.mxu0 0.0
  %897 = vmatpush2.msra.mxu0 0.0
  %898 = vmatprep.subr.mxu0 0.0
  %899 = vmatpush2.msra.mxu0 0.0
  %900 = vmatprep.subr.mxu0 0.0
  %901 = vmatpush2.msra.mxu0 0.0
  %902 = vmatprep.subr.mxu0 0.0
  %903 = vmatpush2.msra.mxu0 0.0
  %904 = vmatprep.mubr.f32.mxu0 0.0
  %905 = vmatmul.mubr.f32.gmra.mxu0 %v793
  %v906 = vpop.f32.mrf.mxu0
  %v907 = vadd.f32 %v714, %v906
  %v908 = vpop.f32.mrf.mxu0
  %909 = vmatprep.mubr.f32.mxu0 0.0
  %910 = vmatmul.mubr.f32.gmra.mxu0 %v796
  %v911 = vpop.f32.mrf.mxu0
  %v912 = vadd.f32 %v719, %v911
  %v913 = vpop.f32.mrf.mxu0
  %914 = vmatprep.mubr.f32.mxu0 0.0
  %915 = vmatmul.mubr.f32.gmra.mxu0 %v799
  %v916 = vpop.f32.mrf.mxu0
  %v917 = vadd.f32 %v724, %v916
  %v918 = vpop.f32.mrf.mxu0
  %919 = vmatprep.mubr.f32.mxu0 0.0
  %920 = vmatmul.mubr.f32.gmra.mxu0 %v802
  %v921 = vpop.f32.mrf.mxu0
  %v922 = vadd.f32 %v729, %v921
  %v923 = vpop.f32.mrf.mxu0
  %924 = vmatprep.mubr.f32.mxu0 0.0
  %925 = vmatmul.mubr.f32.gmra.mxu0 %v805
  %v926 = vpop.f32.mrf.mxu0
  %v927 = vadd.f32 %v734, %v926
  %v928 = vpop.f32.mrf.mxu0
  %929 = vmatprep.mubr.f32.mxu0 0.0
  %930 = vmatmul.mubr.f32.gmra.mxu0 %v808
  %v931 = vpop.f32.mrf.mxu0
  %v932 = vadd.f32 %v739, %v931
  %v933 = vpop.f32.mrf.mxu0
  %934 = vmatprep.mubr.f32.mxu0 0.0
  %935 = vmatmul.mubr.f32.gmra.mxu0 %v811
  %v936 = vpop.f32.mrf.mxu0
  %v937 = vadd.f32 %v744, %v936
  %v938 = vpop.f32.mrf.mxu0
  %939 = vmatprep.mubr.f32.mxu0 0.0
  %940 = vmatmul.mubr.f32.gmra.mxu0 %v814
  %v941 = vpop.f32.mrf.mxu0
  %v942 = vadd.f32 %v749, %v941
  %v943 = vpop.f32.mrf.mxu0
  %944 = vmatprep.mubr.f32.mxu0 0.0
  %945 = vmatmul.mubr.f32.gmra.mxu0 %v817
  %v946 = vpop.f32.mrf.mxu0
  %v947 = vadd.f32 %v754, %v946
  %v948 = vpop.f32.mrf.mxu0
  %949 = vmatprep.mubr.f32.mxu0 0.0
  %950 = vmatmul.mubr.f32.gmra.mxu0 %v820
  %v951 = vpop.f32.mrf.mxu0
  %v952 = vadd.f32 %v759, %v951
  %v953 = vpop.f32.mrf.mxu0
  %954 = vmatprep.mubr.f32.mxu0 0.0
  %955 = vmatmul.mubr.f32.gmra.mxu0 %v823
  %v956 = vpop.f32.mrf.mxu0
  %v957 = vadd.f32 %v764, %v956
  %v958 = vpop.f32.mrf.mxu0
  %959 = vmatprep.mubr.f32.mxu0 0.0
  %960 = vmatmul.mubr.f32.gmra.mxu0 %v826
  %v961 = vpop.f32.mrf.mxu0
  %v962 = vadd.f32 %v769, %v961
  %v963 = vpop.f32.mrf.mxu0
  %964 = vmatprep.mubr.f32.mxu0 0.0
  %965 = vmatmul.mubr.f32.gmra.mxu0 %v829
  %v966 = vpop.f32.mrf.mxu0
  %v967 = vadd.f32 %v774, %v966
  %v968 = vpop.f32.mrf.mxu0
  %969 = vmatprep.mubr.f32.mxu0 0.0
  %970 = vmatmul.mubr.f32.gmra.mxu0 %v832
  %v971 = vpop.f32.mrf.mxu0
  %v972 = vadd.f32 %v779, %v971
  %v973 = vpop.f32.mrf.mxu0
  %974 = vmatprep.mubr.f32.mxu0 0.0
  %975 = vmatmul.mubr.f32.gmra.mxu0 %v835
  %v976 = vpop.f32.mrf.mxu0
  %v977 = vadd.f32 %v784, %v976
  %v978 = vpop.f32.mrf.mxu0
  %979 = vmatprep.mubr.f32.mxu0 0.0
  %980 = vmatmul.mubr.f32.gmra.mxu0 %v838
  %v981 = vpop.f32.mrf.mxu0
  %v982 = vadd.f32 %v789, %v981
  %v983 = vpop.f32.mrf.mxu0
  %984 = vdwg.mxu0
  %v985 = vld [vmem:[#allocation4] sm:$0xff]
  %v987 = vsel %vm598, %v580, 0
  %v990 = vsel %vm598, %v581, 0
  %v993 = vsel %vm598, %v582, 0
  %v996 = vsel %vm598, %v583, 0
  %v999 = vsel %vm598, %v584, 0
  %v1002 = vsel %vm598, %v585, 0
  %v1005 = vsel %vm598, %v586, 0
  %v1008 = vsel %vm598, %v587, 0
  %v1011 = vsel %vm598, %v588, 0
  %v1014 = vsel %vm598, %v589, 0
  %v1017 = vsel %vm598, %v590, 0
  %v1020 = vsel %vm598, %v591, 0
  %v1023 = vsel %vm598, %v592, 0
  %v1026 = vsel %vm598, %v593, 0
  %v1029 = vsel %vm598, %v594, 0
  %v1032 = vsel %vm598, %v595, 0
  %1034 = vmatprep.subr.mxu0 0.0
  %1035 = vmatpush1.msra.mxu0 0.0
  %1036 = vmatprep.subr.mxu0 0.0
  %1037 = vmatpush1.msra.mxu0 0.0
  %1038 = vmatprep.subr.mxu0 0.0
  %1039 = vmatpush1.msra.mxu0 0.0
  %1040 = vmatprep.subr.mxu0 0.0
  %1041 = vmatpush1.msra.mxu0 0.0
  %1042 = vmatprep.subr.mxu0 0.0
  %1043 = vmatpush1.msra.mxu0 0.0
  %1044 = vmatprep.subr.mxu0 0.0
  %1045 = vmatpush1.msra.mxu0 0.0
  %1046 = vmatprep.subr.mxu0 0.0
  %1047 = vmatpush1.msra.mxu0 0.0
  %1048 = vmatprep.subr.mxu0 0.0
  %1049 = vmatpush1.msra.mxu0 0.0
  %1050 = vmatprep.subr.mxu0 0.0
  %1051 = vmatpush1.msra.mxu0 0.0
  %1052 = vmatprep.subr.mxu0 0.0
  %1053 = vmatpush1.msra.mxu0 0.0
  %1054 = vmatprep.subr.mxu0 0.0
  %1055 = vmatpush1.msra.mxu0 0.0
  %1056 = vmatprep.subr.mxu0 0.0
  %1057 = vmatpush1.msra.mxu0 0.0
  %1058 = vmatprep.subr.mxu0 0.0
  %1059 = vmatpush1.msra.mxu0 0.0
  %1060 = vmatprep.subr.mxu0 0.0
  %1061 = vmatpush1.msra.mxu0 0.0
  %1062 = vmatprep.subr.mxu0 0.0
  %1063 = vmatpush1.msra.mxu0 0.0
  %1064 = vmatprep.subr.mxu0 0.0
  %1065 = vmatpush1.msra.mxu0 %v985
  %1066 = vmatprep.subr.mxu0 0.0
  %1067 = vmatpush2.msra.mxu0 0.0
  %1068 = vmatprep.subr.mxu0 0.0
  %1069 = vmatpush2.msra.mxu0 0.0
  %1070 = vmatprep.subr.mxu0 0.0
  %1071 = vmatpush2.msra.mxu0 0.0
  %1072 = vmatprep.subr.mxu0 0.0
  %1073 = vmatpush2.msra.mxu0 0.0
  %1074 = vmatprep.subr.mxu0 0.0
  %1075 = vmatpush2.msra.mxu0 0.0
  %1076 = vmatprep.subr.mxu0 0.0
  %1077 = vmatpush2.msra.mxu0 0.0
  %1078 = vmatprep.subr.mxu0 0.0
  %1079 = vmatpush2.msra.mxu0 0.0
  %1080 = vmatprep.subr.mxu0 0.0
  %1081 = vmatpush2.msra.mxu0 0.0
  %1082 = vmatprep.subr.mxu0 0.0
  %1083 = vmatpush2.msra.mxu0 0.0
  %1084 = vmatprep.subr.mxu0 0.0
  %1085 = vmatpush2.msra.mxu0 0.0
  %1086 = vmatprep.subr.mxu0 0.0
  %1087 = vmatpush2.msra.mxu0 0.0
  %1088 = vmatprep.subr.mxu0 0.0
  %1089 = vmatpush2.msra.mxu0 0.0
  %1090 = vmatprep.subr.mxu0 0.0
  %1091 = vmatpush2.msra.mxu0 0.0
  %1092 = vmatprep.subr.mxu0 0.0
  %1093 = vmatpush2.msra.mxu0 0.0
  %1094 = vmatprep.subr.mxu0 0.0
  %1095 = vmatpush2.msra.mxu0 0.0
  %1096 = vmatprep.subr.mxu0 0.0
  %1097 = vmatpush2.msra.mxu0 0.0
  %1098 = vmatprep.mubr.f32.mxu0 0.0
  %1099 = vmatmul.mubr.f32.gmra.mxu0 %v987
  %v1100 = vpop.f32.mrf.mxu0
  %v1101 = vadd.f32 0.0, %v1100
  %v1102 = vpop.f32.mrf.mxu0
  %1103 = vmatprep.mubr.f32.mxu0 0.0
  %1104 = vmatmul.mubr.f32.gmra.mxu0 %v990
  %v1105 = vpop.f32.mrf.mxu0
  %v1106 = vadd.f32 0.0, %v1105
  %v1107 = vpop.f32.mrf.mxu0
  %1108 = vmatprep.mubr.f32.mxu0 0.0
  %1109 = vmatmul.mubr.f32.gmra.mxu0 %v993
  %v1110 = vpop.f32.mrf.mxu0
  %v1111 = vadd.f32 0.0, %v1110
  %v1112 = vpop.f32.mrf.mxu0
  %1113 = vmatprep.mubr.f32.mxu0 0.0
  %1114 = vmatmul.mubr.f32.gmra.mxu0 %v996
  %v1115 = vpop.f32.mrf.mxu0
  %v1116 = vadd.f32 0.0, %v1115
  %v1117 = vpop.f32.mrf.mxu0
  %1118 = vmatprep.mubr.f32.mxu0 0.0
  %1119 = vmatmul.mubr.f32.gmra.mxu0 %v999
  %v1120 = vpop.f32.mrf.mxu0
  %v1121 = vadd.f32 0.0, %v1120
  %v1122 = vpop.f32.mrf.mxu0
  %1123 = vmatprep.mubr.f32.mxu0 0.0
  %1124 = vmatmul.mubr.f32.gmra.mxu0 %v1002
  %v1125 = vpop.f32.mrf.mxu0
  %v1126 = vadd.f32 0.0, %v1125
  %v1127 = vpop.f32.mrf.mxu0
  %1128 = vmatprep.mubr.f32.mxu0 0.0
  %1129 = vmatmul.mubr.f32.gmra.mxu0 %v1005
  %v1130 = vpop.f32.mrf.mxu0
  %v1131 = vadd.f32 0.0, %v1130
  %v1132 = vpop.f32.mrf.mxu0
  %1133 = vmatprep.mubr.f32.mxu0 0.0
  %1134 = vmatmul.mubr.f32.gmra.mxu0 %v1008
  %v1135 = vpop.f32.mrf.mxu0
  %v1136 = vadd.f32 0.0, %v1135
  %v1137 = vpop.f32.mrf.mxu0
  %1138 = vmatprep.mubr.f32.mxu0 0.0
  %1139 = vmatmul.mubr.f32.gmra.mxu0 %v1011
  %v1140 = vpop.f32.mrf.mxu0
  %v1141 = vadd.f32 0.0, %v1140
  %v1142 = vpop.f32.mrf.mxu0
  %1143 = vmatprep.mubr.f32.mxu0 0.0
  %1144 = vmatmul.mubr.f32.gmra.mxu0 %v1014
  %v1145 = vpop.f32.mrf.mxu0
  %v1146 = vadd.f32 0.0, %v1145
  %v1147 = vpop.f32.mrf.mxu0
  %1148 = vmatprep.mubr.f32.mxu0 0.0
  %1149 = vmatmul.mubr.f32.gmra.mxu0 %v1017
  %v1150 = vpop.f32.mrf.mxu0
  %v1151 = vadd.f32 0.0, %v1150
  %v1152 = vpop.f32.mrf.mxu0
  %1153 = vmatprep.mubr.f32.mxu0 0.0
  %1154 = vmatmul.mubr.f32.gmra.mxu0 %v1020
  %v1155 = vpop.f32.mrf.mxu0
  %v1156 = vadd.f32 0.0, %v1155
  %v1157 = vpop.f32.mrf.mxu0
  %1158 = vmatprep.mubr.f32.mxu0 0.0
  %1159 = vmatmul.mubr.f32.gmra.mxu0 %v1023
  %v1160 = vpop.f32.mrf.mxu0
  %v1161 = vadd.f32 0.0, %v1160
  %v1162 = vpop.f32.mrf.mxu0
  %1163 = vmatprep.mubr.f32.mxu0 0.0
  %1164 = vmatmul.mubr.f32.gmra.mxu0 %v1026
  %v1165 = vpop.f32.mrf.mxu0
  %v1166 = vadd.f32 0.0, %v1165
  %v1167 = vpop.f32.mrf.mxu0
  %1168 = vmatprep.mubr.f32.mxu0 0.0
  %1169 = vmatmul.mubr.f32.gmra.mxu0 %v1029
  %v1170 = vpop.f32.mrf.mxu0
  %v1171 = vadd.f32 0.0, %v1170
  %v1172 = vpop.f32.mrf.mxu0
  %1173 = vmatprep.mubr.f32.mxu0 0.0
  %1174 = vmatmul.mubr.f32.gmra.mxu0 %v1032
  %v1175 = vpop.f32.mrf.mxu0
  %v1176 = vadd.f32 0.0, %v1175
  %v1177 = vpop.f32.mrf.mxu0
  %1178 = vdwg.mxu0
  %v1179 = vadd.f32 %v907, %v1101
  %v1180 = vadd.f32 %v912, %v1106
  %v1181 = vadd.f32 %v917, %v1111
  %v1182 = vadd.f32 %v922, %v1116
  %v1183 = vadd.f32 %v927, %v1121
  %v1184 = vadd.f32 %v932, %v1126
  %v1185 = vadd.f32 %v937, %v1131
  %v1186 = vadd.f32 %v942, %v1136
  %v1187 = vadd.f32 %v947, %v1141
  %v1188 = vadd.f32 %v952, %v1146
  %v1189 = vadd.f32 %v957, %v1151
  %v1190 = vadd.f32 %v962, %v1156
  %v1191 = vadd.f32 %v967, %v1161
  %v1192 = vadd.f32 %v972, %v1166
  %v1193 = vadd.f32 %v977, %v1171
  %v1194 = vadd.f32 %v982, %v1176
  %v1195 = vld [vmem:[%s4] sm:$0x1]
  %v1197 = vlaneseq
  %v1198 = vshrl.u32 %v1197, 7
  %v1199 = vsub.s32 0, %v1198
  %v1200 = vrot.slane %v1195, %v1199
  %v1202 = vadd.f32 %v1179, %v1200
  %v1203 = vadd.f32 %v1180, %v1200
  %v1204 = vadd.f32 %v1181, %v1200
  %v1205 = vadd.f32 %v1182, %v1200
  %v1206 = vadd.f32 %v1183, %v1200
  %v1207 = vadd.f32 %v1184, %v1200
  %v1208 = vadd.f32 %v1185, %v1200
  %v1209 = vadd.f32 %v1186, %v1200
  %v1210 = vadd.f32 %v1187, %v1200
  %v1211 = vadd.f32 %v1188, %v1200
  %v1212 = vadd.f32 %v1189, %v1200
  %v1213 = vadd.f32 %v1190, %v1200
  %v1214 = vadd.f32 %v1191, %v1200
  %v1215 = vadd.f32 %v1192, %v1200
  %v1216 = vadd.f32 %v1193, %v1200
  %v1217 = vadd.f32 %v1194, %v1200
  %v1218 = vmax.f32 %v1202, 0.0
  %v1219 = vmax.f32 %v1203, 0.0
  %v1220 = vmax.f32 %v1204, 0.0
  %v1221 = vmax.f32 %v1205, 0.0
  %v1222 = vmax.f32 %v1206, 0.0
  %v1223 = vmax.f32 %v1207, 0.0
  %v1224 = vmax.f32 %v1208, 0.0
  %v1225 = vmax.f32 %v1209, 0.0
  %v1226 = vmax.f32 %v1210, 0.0
  %v1227 = vmax.f32 %v1211, 0.0
  %v1228 = vmax.f32 %v1212, 0.0
  %v1229 = vmax.f32 %v1213, 0.0
  %v1230 = vmax.f32 %v1214, 0.0
  %v1231 = vmax.f32 %v1215, 0.0
  %v1232 = vmax.f32 %v1216, 0.0
  %v1233 = vmax.f32 %v1217, 0.0
  %1234 = vst [vmem:[%s5] sm:$0xff] %v1218
  %1235 = vst [vmem:[%s5 + $0x8] sm:$0xff] %v1219
  %1236 = vst [vmem:[%s5 + $0x10] sm:$0xff] %v1220
  %1237 = vst [vmem:[%s5 + $0x18] sm:$0xff] %v1221
  %1238 = vst [vmem:[%s5 + $0x20] sm:$0xff] %v1222
  %1239 = vst [vmem:[%s5 + $0x28] sm:$0xff] %v1223
  %1240 = vst [vmem:[%s5 + $0x30] sm:$0xff] %v1224
  %1241 = vst [vmem:[%s5 + $0x38] sm:$0xff] %v1225
  %1242 = vst [vmem:[%s5 + $0x40] sm:$0xff] %v1226
  %1243 = vst [vmem:[%s5 + $0x48] sm:$0xff] %v1227
  %1244 = vst [vmem:[%s5 + $0x50] sm:$0xff] %v1228
  %1245 = vst [vmem:[%s5 + $0x58] sm:$0xff] %v1229
  %1246 = vst [vmem:[%s5 + $0x60] sm:$0xff] %v1230
  %1247 = vst [vmem:[%s5 + $0x68] sm:$0xff] %v1231
  %1248 = vst [vmem:[%s5 + $0x70] sm:$0xff] %v1232
  %1249 = vst [vmem:[%s5 + $0x78] sm:$0xff] %v1233
  // Predicated region
  $region26: #{phrase_inference.1} parent=0 // pred_check
    _
  $region27: #{phrase_inference.1} parent=0 // pred_check_branch
    %1251 = sbr.rel (0) target = $region29
  $region28: #{phrase_inference.1} parent=0 // pred_region
    _
  $region29: #{phrase_inference.1} parent=0 // pred_fallthru
    _
  // Predicated region
  $region30: #{phrase_inference.1} parent=0 // pred_check
    _
  $region31: #{phrase_inference.1} parent=0 // pred_check_branch
    %1253 = sbr.rel (0) target = $region33
  $region32: #{phrase_inference.1} parent=0 // pred_region
    _
  $region33: #{phrase_inference.1} parent=0 // pred_fallthru
    _

</llo_original>
